<compile_context>
chip_gen: v6e
topology: v6e:2x2x1
jax: 0.10.0
libtpu: 0.0.40
codegen_flags: <defaults>
</compile_context>

<pallas_src>
import jax
import jax.numpy as jnp
import numpy as np
from jax.experimental import pallas as pl
from jax.experimental.pallas import tpu as pltpu


# --------------------------------------------------------------------------
# Deterministic parameter init (mirrors torch.nn.init.orthogonal_ * std, bias=0)
# --------------------------------------------------------------------------
def orthogonal_init(key, fan_in, fan_out, std):
    """Orthogonal matrix of shape (fan_in, fan_out) scaled by `std`."""
    if std == 0.0:
        return jnp.zeros((fan_in, fan_out), jnp.float32)
    n_rows, n_cols = fan_out, fan_in          # torch weight is (out, in)
    a = jax.random.normal(key, (max(n_rows, n_cols), min(n_rows, n_cols)),
                          dtype=jnp.float32)
    q, r = jnp.linalg.qr(a)
    q = q * jnp.sign(jnp.diag(r))
    if n_rows < n_cols:
        q = q.T
    w_torch = q[:n_rows, :n_cols] * std       # (out, in)
    return w_torch.T.astype(jnp.float32)      # (in, out)


def make_params(key, shape_in, action_shape, hidden_size=64):
    ks = jax.random.split(key, 7)
    return {
        # policy
        "w1p": orthogonal_init(ks[0], shape_in, hidden_size, np.sqrt(2)),
        "b1p": jnp.zeros((1, hidden_size), jnp.float32),
        "w2p": orthogonal_init(ks[1], hidden_size, hidden_size, np.sqrt(2)),
        "b2p": jnp.zeros((1, hidden_size), jnp.float32),
        "wmu": orthogonal_init(ks[2], hidden_size, action_shape, 0.01),
        "bmu": jnp.zeros((1, action_shape), jnp.float32),
        "wstd": orthogonal_init(ks[3], hidden_size, action_shape, 0.0),
        "bstd": jnp.zeros((1, action_shape), jnp.float32),
        # value
        "w1v": orthogonal_init(ks[4], shape_in, hidden_size, np.sqrt(2)),
        "b1v": jnp.zeros((1, hidden_size), jnp.float32),
        "w2v": orthogonal_init(ks[5], hidden_size, hidden_size, np.sqrt(2)),
        "b2v": jnp.zeros((1, hidden_size), jnp.float32),
        "w3v": orthogonal_init(ks[6], hidden_size, 1, 1.0),
        "b3v": jnp.zeros((1, 1), jnp.float32),
    }


# --------------------------------------------------------------------------
# One-time weight packing: 13 arrays -> single (R, 128) bf16 buffer
# Row offsets are 16-aligned (bf16 sublane tiling) for cheap static slices.
# --------------------------------------------------------------------------
def pack_params(p, shape_in, action_shape, hidden=64):
    L = 2 * hidden                               # 128 lanes: [policy | value]
    assert L == 128, "fused layout assumes hidden_size == 64"
    A = action_shape
    out_lanes = ((2 * A + 1 + 7) // 8) * 8       # mu|log_std|value padded to 8
    assert out_lanes <= L
    K_pad = ((shape_in + 15) // 16) * 16         # 16-row align input dim
    PAD = 16                                     # bias rows padded to 16

    w1 = jnp.zeros((K_pad, L), jnp.float32)
    w1 = w1.at[:shape_in, :hidden].set(p["w1p"])
    w1 = w1.at[:shape_in, hidden:].set(p["w1v"])
    b1 = jnp.zeros((PAD, L), jnp.float32)
    b1 = b1.at[0, :hidden].set(p["b1p"][0]).at[0, hidden:].set(p["b1v"][0])

    w2 = jnp.zeros((L, L), jnp.float32)          # block-diagonal layer 2
    w2 = w2.at[:hidden, :hidden].set(p["w2p"]).at[hidden:, hidden:].set(p["w2v"])
    b2 = jnp.zeros((PAD, L), jnp.float32)
    b2 = b2.at[0, :hidden].set(p["b2p"][0]).at[0, hidden:].set(p["b2v"][0])

    wh = jnp.zeros((L, L), jnp.float32)          # fused heads, lane-padded
    wh = wh.at[:hidden, :A].set(p["wmu"])
    wh = wh.at[:hidden, A:2 * A].set(p["wstd"])
    wh = wh.at[hidden:, 2 * A:2 * A + 1].set(p["w3v"])
    bh = jnp.zeros((PAD, L), jnp.float32)
    bh = bh.at[0, :A].set(p["bmu"][0])
    bh = bh.at[0, A:2 * A].set(p["bstd"][0])
    bh = bh.at[0, 2 * A].set(p["b3v"][0, 0])

    packed = jnp.concatenate([w1, b1, w2, b2, wh, bh], axis=0)
    packed = packed.astype(jnp.bfloat16)         # bf16-native MXU operands
    meta = dict(
        shape_in=shape_in, action=A, hidden=hidden, lane=L,
        out_lanes=out_lanes,
        off_w1=0,
        off_b1=K_pad,
        off_w2=K_pad + PAD,
        off_b2=K_pad + PAD + L,
        off_wh=K_pad + 2 * PAD + L,
        off_bh=K_pad + 2 * PAD + 2 * L,
        rows=K_pad + 3 * PAD + 2 * L,
    )
    return packed, meta


# --------------------------------------------------------------------------
# Pallas kernel: fused actor-critic forward on one batch tile
# --------------------------------------------------------------------------
def _make_kernel(meta):
    K, L, OUT = meta["shape_in"], meta["lane"], meta["out_lanes"]
    o_w1, o_b1 = meta["off_w1"], meta["off_b1"]
    o_w2, o_b2 = meta["off_w2"], meta["off_b2"]
    o_wh, o_bh = meta["off_wh"], meta["off_bh"]

    def kernel(x_ref, p_ref, out_ref):
        # x: (tile_b, K) f32 -> bf16 for the MXU (accumulate in f32)
        x = x_ref[...].astype(jnp.bfloat16)

        w1 = p_ref[o_w1:o_w1 + K, :]                         # (K, 128) bf16
        b1 = p_ref[o_b1:o_b1 + 1, :].astype(jnp.float32)
        w2 = p_ref[o_w2:o_w2 + L, :]                         # (128, 128) bf16
        b2 = p_ref[o_b2:o_b2 + 1, :].astype(jnp.float32)
        wh = p_ref[o_wh:o_wh + L, :]                         # (128, 128) bf16
        bh = p_ref[o_bh:o_bh + 1, :].astype(jnp.float32)

        # fused trunks: one 128-wide matmul per layer; elementwise math in f32
        h1 = jnp.tanh(jnp.dot(x, w1, preferred_element_type=jnp.float32) + b1)
        h2 = jnp.tanh(jnp.dot(h1.astype(jnp.bfloat16), w2,
                              preferred_element_type=jnp.float32) + b2)

        # fused heads: [ mu | log_std | value | 0... ] in one matmul
        head = jnp.dot(h2.astype(jnp.bfloat16), wh,
                       preferred_element_type=jnp.float32) + bh

        # store only the useful lanes (padded to OUT); exp(sigma) done outside
        out_ref[...] = head[:, :OUT]

    return kernel


# --------------------------------------------------------------------------
# Wrapper: batch-tiled parallel grid, no host padding, single weight DMA
# --------------------------------------------------------------------------
def network_forward(x, packed, meta, *, tile_b=2048):
    B, K = x.shape
    assert K == meta["shape_in"]
    A, L, OUT = meta["action"], meta["lane"], meta["out_lanes"]
    rows = meta["rows"]

    if B <= 8:
        tile = B                                  # block == full batch dim
    else:
        # cap tile at ceil(B/2) (8-aligned) so large batches give >=2 parallel
        # grid steps (v7x megacore uses both TensorCores); otherwise use the
        # largest tile <= tile_b.
        half = ((-(-B // 2)) + 7) // 8 * 8
        tile = max(8, min(tile_b, half))
    grid = (pl.cdiv(B, tile),)

    out = pl.pallas_call(
        _make_kernel(meta),
        out_shape=jax.ShapeDtypeStruct((B, OUT), jnp.float32),
        grid=grid,
        in_specs=[
            pl.BlockSpec((tile, K), lambda i: (i, 0)),        # x tile
            pl.BlockSpec((rows, L), lambda i: (0, 0)),        # weights resident
        ],
        out_specs=pl.BlockSpec((tile, OUT), lambda i: (i, 0)),
        compiler_params=pltpu.CompilerParams(
            dimension_semantics=("parallel",)),
    )(x.astype(jnp.float32), packed)

    mu = out[:, :A]
    sigma = jnp.exp(out[:, A:2 * A])              # exp on the narrow slice only
    val = out[:, 2 * A:2 * A + 1]
    return (mu, sigma), val


# --------------------------------------------------------------------------
# Reference (pure JAX, unfused f32 params) for sanity check
# --------------------------------------------------------------------------
def network_ref(x, p):
    h = jnp.tanh(jnp.tanh(x @ p["w1p"] + p["b1p"]) @ p["w2p"] + p["b2p"])
    mu = h @ p["wmu"] + p["bmu"]
    sigma = jnp.exp(h @ p["wstd"] + p["bstd"])
    hv = jnp.tanh(jnp.tanh(x @ p["w1v"] + p["b1v"]) @ p["w2v"] + p["b2v"])
    val = hv @ p["w3v"] + p["b3v"]
    return (mu, sigma), val


if __name__ == "__main__":
    key = jax.random.PRNGKey(0)
    k_params, k_x = jax.random.split(key)

    SHAPE_IN = 17       # HalfCheetah observation dim
    ACTION_SHAPE = 6    # HalfCheetah action dim
    HIDDEN = 64
    BATCH = 8

    params = make_params(k_params, SHAPE_IN, ACTION_SHAPE, HIDDEN)
    packed, meta = pack_params(params, SHAPE_IN, ACTION_SHAPE, HIDDEN)
    x = jax.random.normal(k_x, (BATCH, SHAPE_IN), dtype=jnp.float32)

    (mu, sigma), val = network_forward(x, packed, meta)
    jax.block_until_ready((mu, sigma, val))

    (mu_r, sigma_r), val_r = network_ref(x, params)
    # bf16 MXU operands -> relaxed tolerance vs the f32 reference
    assert jnp.allclose(mu, mu_r, atol=2e-2, rtol=2e-2), "mu mismatch"
    assert jnp.allclose(sigma, sigma_r, atol=2e-2, rtol=2e-2), "sigma mismatch"
    assert jnp.allclose(val, val_r, atol=2e-2, rtol=2e-2), "value mismatch"

    print("KERNEL_OK")
</pallas_src>

<mosaic_0001>
module attributes {stable_mosaic.version = 11 : i64} {
  func.func @kernel(%arg0: i32, %arg1: memref<8x17xf32, #tpu.memory_space<vmem>>, %arg2: memref<336x128xbf16, #tpu.memory_space<vmem>>, %arg3: memref<8x16xf32, #tpu.memory_space<vmem>>) attributes {dimension_semantics = [#tpu.dimension_semantics<parallel>], iteration_bounds = array<i64: 1>, scalar_prefetch = 0 : i64, scratch_operands = 0 : i64, tpu.core_type = #tpu.core_type<tc>, window_params = [{transform_indices = @transform_0, window_bounds = array<i64: 8, 17>}, {pipeline_mode = #tpu.pipeline_mode<synchronous>, transform_indices = @transform_1, window_bounds = array<i64: 336, 128>}, {transform_indices = @transform_2, window_bounds = array<i64: 8, 16>}]} {
    %c0 = arith.constant 0 : index
    %c0_0 = arith.constant 0 : index
    %0 = vector.load %arg1[%c0, %c0_0] : memref<8x17xf32, #tpu.memory_space<vmem>>, vector<8x17xf32>
    %1 = arith.truncf %0 : vector<8x17xf32> to vector<8x17xbf16>
    %c0_1 = arith.constant 0 : index
    %c0_2 = arith.constant 0 : index
    %2 = vector.load %arg2[%c0_1, %c0_2] : memref<336x128xbf16, #tpu.memory_space<vmem>>, vector<17x128xbf16>
    %c32 = arith.constant 32 : index
    %c0_3 = arith.constant 0 : index
    %3 = vector.load %arg2[%c32, %c0_3] : memref<336x128xbf16, #tpu.memory_space<vmem>>, vector<1x128xbf16>
    %4 = arith.extf %3 : vector<1x128xbf16> to vector<1x128xf32>
    %c48 = arith.constant 48 : index
    %c0_4 = arith.constant 0 : index
    %5 = vector.load %arg2[%c48, %c0_4] : memref<336x128xbf16, #tpu.memory_space<vmem>>, vector<128x128xbf16>
    %c176 = arith.constant 176 : index
    %c0_5 = arith.constant 0 : index
    %6 = vector.load %arg2[%c176, %c0_5] : memref<336x128xbf16, #tpu.memory_space<vmem>>, vector<1x128xbf16>
    %7 = arith.extf %6 : vector<1x128xbf16> to vector<1x128xf32>
    %c192 = arith.constant 192 : index
    %c0_6 = arith.constant 0 : index
    %8 = vector.load %arg2[%c192, %c0_6] : memref<336x128xbf16, #tpu.memory_space<vmem>>, vector<128x128xbf16>
    %c320 = arith.constant 320 : index
    %c0_7 = arith.constant 0 : index
    %9 = vector.load %arg2[%c320, %c0_7] : memref<336x128xbf16, #tpu.memory_space<vmem>>, vector<1x128xbf16>
    %10 = arith.extf %9 : vector<1x128xbf16> to vector<1x128xf32>
    %cst = arith.constant dense<0.000000e+00> : vector<8x128xf32>
    %11 = tpu.matmul %1, %2, %cst {dimension_numbers = #tpu.dot_dimension_numbers<[1], [0], [0], [1], [0, 0, 1, 1], [], []>} : vector<8x17xbf16>, vector<17x128xbf16>, vector<8x128xf32> -> vector<8x128xf32>
    %12 = vector.broadcast %4 : vector<1x128xf32> to vector<8x128xf32>
    %13 = arith.addf %11, %12 : vector<8x128xf32>
    %14 = math.tanh %13 : vector<8x128xf32>
    %15 = arith.truncf %14 : vector<8x128xf32> to vector<8x128xbf16>
    %cst_8 = arith.constant dense<0.000000e+00> : vector<8x128xf32>
    %16 = tpu.matmul %15, %5, %cst_8 {dimension_numbers = #tpu.dot_dimension_numbers<[1], [0], [0], [1], [0, 0, 1, 1], [], []>} : vector<8x128xbf16>, vector<128x128xbf16>, vector<8x128xf32> -> vector<8x128xf32>
    %17 = vector.broadcast %7 : vector<1x128xf32> to vector<8x128xf32>
    %18 = arith.addf %16, %17 : vector<8x128xf32>
    %19 = math.tanh %18 : vector<8x128xf32>
    %20 = arith.truncf %19 : vector<8x128xf32> to vector<8x128xbf16>
    %cst_9 = arith.constant dense<0.000000e+00> : vector<8x128xf32>
    %21 = tpu.matmul %20, %8, %cst_9 {dimension_numbers = #tpu.dot_dimension_numbers<[1], [0], [0], [1], [0, 0, 1, 1], [], []>} : vector<8x128xbf16>, vector<128x128xbf16>, vector<8x128xf32> -> vector<8x128xf32>
    %22 = vector.broadcast %10 : vector<1x128xf32> to vector<8x128xf32>
    %23 = arith.addf %21, %22 : vector<8x128xf32>
    %24 = vector.extract_strided_slice %23 {offsets = [0, 0], sizes = [8, 16], strides = [1, 1]} : vector<8x128xf32> to vector<8x16xf32>
    %c0_10 = arith.constant 0 : index
    %c0_11 = arith.constant 0 : index
    %25 = vector.load %arg3[%c0_10, %c0_11] : memref<8x16xf32, #tpu.memory_space<vmem>>, vector<8x16xf32>
    tpu.vector_store %arg3[%c0_10, %c0_11], %24 {strides = array<i32>} : memref<8x16xf32, #tpu.memory_space<vmem>>, vector<8x16xf32>,
    return
  }
  func.func @transform_0(%arg0: i32) -> (i32, i32) {
    %c0_i32 = arith.constant 0 : i32
    %c0_i32_0 = arith.constant 0 : i32
    return %arg0, %c0_i32 : i32, i32
  }
  func.func @transform_1(%arg0: i32) -> (i32, i32) {
    %c0_i32 = arith.constant 0 : i32
    %c0_i32_0 = arith.constant 0 : i32
    %c0_i32_1 = arith.constant 0 : i32
    return %c0_i32, %c0_i32_0 : i32, i32
  }
  func.func @transform_2(%arg0: i32) -> (i32, i32) {
    %c0_i32 = arith.constant 0 : i32
    %c0_i32_0 = arith.constant 0 : i32
    return %arg0, %c0_i32 : i32, i32
  }
}

</mosaic_0001>

<llo_original>
// kernel: tpu_custom_call.1
$region0: #{tpu_custom_call.1}
  #allocation0 [shape = 'u32[]', space=smem, size = 0x4, offset = 0x4, fixed_abs, tag = 'smem constant byte address 0x4 - core index']
  #allocation1 [shape = 'u32[144,128]{1,0:T(1,128)}', space=vmem, size = 0x12000, scoped, tag = 'internal scratch']
  %s0 = inlined_call_operand.hbm [shape: f32[8,17], index: 0, kind: input, shape index: {}]
  %s1 = inlined_call_operand.hbm [shape: bf16[336,128], index: 1, kind: input, shape index: {}]
  %s2 = inlined_call_operand.hbm [shape: f32[8,16], index: 2, kind: output, shape index: {}]
  %s3 = sld [smem:[#allocation0]]
  $region26: #{tpu_custom_call.1} parent=0
    _
  %s5 = ssub.s32 1, %s3
  %s6 = scalar_select 0, %s5, %s3
  $region1: #{tpu_custom_call.1} parent=0
    #allocation2 [shape = 'u8[4096]{0}', space=vmem, size = 0x1000, scoped, tag = 'input window, operand 0, single buffered']
    #allocation3 [shape = 's32[1]{0}', space=sflag, size = 0x4, scoped, tag = 'scoped memory for tpu_custom_call.1']
    #allocation4 [shape = 's32[1]{0}', space=sflag, size = 0x4, scoped, tag = 'scoped memory for tpu_custom_call.1']
    #allocation5 [shape = 'u8[86016]{0}', space=vmem, size = 0x15000, scoped, tag = 'input window, operand 1, single buffered']
    #allocation6 [shape = 's32[1]{0}', space=sflag, size = 0x4, scoped, tag = 'scoped memory for tpu_custom_call.1']
    #allocation7 [shape = 'u8[4096]{0}', space=vmem, size = 0x1000, scoped, tag = 'output window, operand 0, single buffered']
    %7 = vsyncpa [#allocation3], 0
    %8 = vsyncpa [#allocation6], 0
    %9 = vsyncpa [#allocation4], 0
    // Predicated region
    $region2: #{tpu_custom_call.1} parent=1 // pred_check
      _
    $region3: #{tpu_custom_call.1} parent=1 // pred_check_branch
      %11 = sbr.rel (0) target = $region5
    $region4: #{tpu_custom_call.1} parent=1 // pred_region
      %s13 = ssub.s32 128, 128
      %14 = vsyncadd [#allocation3], %s13
      %s16 = sshll.u32 [#allocation2], 4
      %s17 = int_to_ptr.vmem [resolvable:$true] %s16
      %19 = dma.hbm_to_vmem [thread:$0]  %s0, 128, %s17, [#allocation3]
    $region5: #{tpu_custom_call.1} parent=1 // pred_fallthru
      _
    // Predicated region
    $region6: #{tpu_custom_call.1} parent=1 // pred_check
      _
    $region7: #{tpu_custom_call.1} parent=1 // pred_check_branch
      %21 = sbr.rel (0) target = $region9
    $region8: #{tpu_custom_call.1} parent=1 // pred_region
      %s23 = ssub.s32 2688, 2688
      %24 = vsyncadd [#allocation6], %s23
      %s25 = sshll.u32 [#allocation5], 4
      %s26 = int_to_ptr.vmem [resolvable:$true] %s25
      %31 = dma.hbm_to_vmem [thread:$0]  %s1, 2688, %s26, [#allocation6], 64, 64, 4
    $region9: #{tpu_custom_call.1} parent=1 // pred_fallthru
      _
    // Predicated region
    $region10: #{tpu_custom_call.1} parent=1 // pred_check
      _
    $region11: #{tpu_custom_call.1} parent=1 // pred_check_branch
      %33 = sbr.rel (0) target = $region13
    $region12: #{tpu_custom_call.1} parent=1 // pred_region
      %34 = dma.done [#allocation3], 128
    $region13: #{tpu_custom_call.1} parent=1 // pred_fallthru
      _
    // Predicated region
    $region14: #{tpu_custom_call.1} parent=1 // pred_check
      _
    $region15: #{tpu_custom_call.1} parent=1 // pred_check_branch
      %36 = sbr.rel (0) target = $region17
    $region16: #{tpu_custom_call.1} parent=1 // pred_region
      %37 = dma.done [#allocation6], 2688
    $region17: #{tpu_custom_call.1} parent=1 // pred_fallthru
      _
    %v39 = vld [vmem:[#allocation2] sm:$0xff]
    %v40 = vpack.c.bf16 %v39, %v39
    %v41 = vld [vmem:[#allocation5] sm:$0xf]
    %v42 = vld [vmem:[#allocation5 + $0x4] sm:$0xf]
    %v43 = vld [vmem:[#allocation5 + $0x8] sm:$0x1]
    %v44 = vld [vmem:[#allocation5 + $0x10] sm:$0x1]
    %v45 = vunpack.c.l.bf16 %v44
    %v46 = vld [vmem:[#allocation5 + $0x18] sm:$0xf]
    %v47 = vld [vmem:[#allocation5 + $0x1c] sm:$0xf]
    %v48 = vld [vmem:[#allocation5 + $0x20] sm:$0xf]
    %v49 = vld [vmem:[#allocation5 + $0x24] sm:$0xf]
    %v50 = vld [vmem:[#allocation5 + $0x28] sm:$0xf]
    %v51 = vld [vmem:[#allocation5 + $0x2c] sm:$0xf]
    %v52 = vld [vmem:[#allocation5 + $0x30] sm:$0xf]
    %v53 = vld [vmem:[#allocation5 + $0x34] sm:$0xf]
    %v54 = vld [vmem:[#allocation5 + $0x38] sm:$0xf]
    %v55 = vld [vmem:[#allocation5 + $0x3c] sm:$0xf]
    %v56 = vld [vmem:[#allocation5 + $0x40] sm:$0xf]
    %v57 = vld [vmem:[#allocation5 + $0x44] sm:$0xf]
    %v58 = vld [vmem:[#allocation5 + $0x48] sm:$0xf]
    %v59 = vld [vmem:[#allocation5 + $0x4c] sm:$0xf]
    %v60 = vld [vmem:[#allocation5 + $0x50] sm:$0xf]
    %v61 = vld [vmem:[#allocation5 + $0x54] sm:$0xf]
    %v62 = vld [vmem:[#allocation5 + $0x58] sm:$0x1]
    %v63 = vunpack.c.l.bf16 %v62
    %v64 = vld [vmem:[#allocation5 + $0x60] sm:$0xf]
    %v65 = vld [vmem:[#allocation5 + $0x64] sm:$0xf]
    %v66 = vld [vmem:[#allocation5 + $0x68] sm:$0xf]
    %v67 = vld [vmem:[#allocation5 + $0x6c] sm:$0xf]
    %v68 = vld [vmem:[#allocation5 + $0x70] sm:$0xf]
    %v69 = vld [vmem:[#allocation5 + $0x74] sm:$0xf]
    %v70 = vld [vmem:[#allocation5 + $0x78] sm:$0xf]
    %v71 = vld [vmem:[#allocation5 + $0x7c] sm:$0xf]
    %v72 = vld [vmem:[#allocation5 + $0x80] sm:$0xf]
    %v73 = vld [vmem:[#allocation5 + $0x84] sm:$0xf]
    %v74 = vld [vmem:[#allocation5 + $0x88] sm:$0xf]
    %v75 = vld [vmem:[#allocation5 + $0x8c] sm:$0xf]
    %v76 = vld [vmem:[#allocation5 + $0x90] sm:$0xf]
    %v77 = vld [vmem:[#allocation5 + $0x94] sm:$0xf]
    %v78 = vld [vmem:[#allocation5 + $0x98] sm:$0xf]
    %v79 = vld [vmem:[#allocation5 + $0x9c] sm:$0xf]
    %v80 = vld [vmem:[#allocation5 + $0xa0] sm:$0x1]
    %v81 = vunpack.c.l.bf16 %v80
    %v82 = vlaneseq
    %v83 = vshrl.u32 %v82, 7
    %v84 = vsub.s32 0, %v83
    %v85 = vrot.slane %v45, %v84
    %v89 = vunpack.c.l.b16 %v41
    %v90 = vunpack.c.l.b16 %v42
    %v91 = vunpack.c.l.b16 %v43
    %v92 = vpack.c.b16 %v90, %v89
    %v93 = vpack.c.b16 %v91, %v91
    %vm95 = vcmask 138240
    %v97 = vsel %vm95, %v40, 0
    %vm99 = vcmask 1040384
    %v100 = vsel 0, 4294967295, 65535
    %v101 = vsel %vm99, %v100, 0
    %v103 = vand.u32 %v93, %v101
    %105 = vmatprep.subr.bf16.mxu0 0
    %106 = vmatpush1.bf16.msra.mxu0 0
    %107 = vmatprep.subr.bf16.mxu0 0
    %108 = vmatpush1.bf16.msra.mxu0 0
    %109 = vmatprep.subr.bf16.mxu0 0
    %110 = vmatpush1.bf16.msra.mxu0 0
    %111 = vmatprep.subr.bf16.mxu0 0
    %112 = vmatpush1.bf16.msra.mxu0 0
    %113 = vmatprep.subr.bf16.mxu0 0
    %114 = vmatpush1.bf16.msra.mxu0 0
    %115 = vmatprep.subr.bf16.mxu0 0
    %116 = vmatpush1.bf16.msra.mxu0 0
    %117 = vmatprep.subr.bf16.mxu0 0
    %118 = vmatpush1.bf16.msra.mxu0 %v103
    %119 = vmatprep.subr.bf16.mxu0 0
    %120 = vmatpush1.bf16.msra.mxu0 %v92
    %121 = vmatprep.subr.bf16.mxu0 0
    %122 = vmatpush2.bf16.msra.mxu0 0
    %123 = vmatprep.subr.bf16.mxu0 0
    %124 = vmatpush2.bf16.msra.mxu0 0
    %125 = vmatprep.subr.bf16.mxu0 0
    %126 = vmatpush2.bf16.msra.mxu0 0
    %127 = vmatprep.subr.bf16.mxu0 0
    %128 = vmatpush2.bf16.msra.mxu0 0
    %129 = vmatprep.subr.bf16.mxu0 0
    %130 = vmatpush2.bf16.msra.mxu0 0
    %131 = vmatprep.subr.bf16.mxu0 0
    %132 = vmatpush2.bf16.msra.mxu0 0
    %133 = vmatprep.subr.bf16.mxu0 0
    %134 = vmatpush2.bf16.msra.mxu0 0
    %135 = vmatprep.subr.bf16.mxu0 0
    %136 = vmatpush2.bf16.msra.mxu0 0
    %137 = vmatprep.mubr.bf16.mxu0 0
    %138 = vmatmul.mubr.bf16.gmra.mxu0 %v97
    %v139 = vpop.f32.mrf.mxu0
    %v140 = vadd.f32 %v85, %v139
    %v141 = vpop.f32.mrf.mxu0
    %v142 = vpop.f32.mrf.mxu0
    %v143 = vpop.f32.mrf.mxu0
    %144 = vdwg.mxu0
    %v145 = vtanh.pop %v140
    %v146 = vpack.c.bf16 %v145, %v145
    %v147 = vlaneseq
    %v148 = vshrl.u32 %v147, 7
    %v149 = vsub.s32 0, %v148
    %v150 = vrot.slane %v63, %v149
    %v167 = vunpack.c.l.b16 %v46
    %v168 = vunpack.c.l.b16 %v47
    %v169 = vunpack.c.l.b16 %v48
    %v170 = vunpack.c.l.b16 %v49
    %v171 = vunpack.c.l.b16 %v50
    %v172 = vunpack.c.l.b16 %v51
    %v173 = vunpack.c.l.b16 %v52
    %v174 = vunpack.c.l.b16 %v53
    %v175 = vunpack.c.l.b16 %v54
    %v176 = vunpack.c.l.b16 %v55
    %v177 = vunpack.c.l.b16 %v56
    %v178 = vunpack.c.l.b16 %v57
    %v179 = vunpack.c.l.b16 %v58
    %v180 = vunpack.c.l.b16 %v59
    %v181 = vunpack.c.l.b16 %v60
    %v182 = vunpack.c.l.b16 %v61
    %v183 = vpack.c.b16 %v168, %v167
    %v184 = vpack.c.b16 %v170, %v169
    %v185 = vpack.c.b16 %v172, %v171
    %v186 = vpack.c.b16 %v174, %v173
    %v187 = vpack.c.b16 %v176, %v175
    %v188 = vpack.c.b16 %v178, %v177
    %v189 = vpack.c.b16 %v180, %v179
    %v190 = vpack.c.b16 %v182, %v181
    %199 = vmatprep.subr.bf16.mxu0 0
    %200 = vmatpush1.bf16.msra.mxu0 %v190
    %201 = vmatprep.subr.bf16.mxu0 0
    %202 = vmatpush1.bf16.msra.mxu0 %v189
    %203 = vmatprep.subr.bf16.mxu0 0
    %204 = vmatpush1.bf16.msra.mxu0 %v188
    %205 = vmatprep.subr.bf16.mxu0 0
    %206 = vmatpush1.bf16.msra.mxu0 %v187
    %207 = vmatprep.subr.bf16.mxu0 0
    %208 = vmatpush1.bf16.msra.mxu0 %v186
    %209 = vmatprep.subr.bf16.mxu0 0
    %210 = vmatpush1.bf16.msra.mxu0 %v185
    %211 = vmatprep.subr.bf16.mxu0 0
    %212 = vmatpush1.bf16.msra.mxu0 %v184
    %213 = vmatprep.subr.bf16.mxu0 0
    %214 = vmatpush1.bf16.msra.mxu0 %v183
    %215 = vmatprep.subr.bf16.mxu0 0
    %216 = vmatpush2.bf16.msra.mxu0 0
    %217 = vmatprep.subr.bf16.mxu0 0
    %218 = vmatpush2.bf16.msra.mxu0 0
    %219 = vmatprep.subr.bf16.mxu0 0
    %220 = vmatpush2.bf16.msra.mxu0 0
    %221 = vmatprep.subr.bf16.mxu0 0
    %222 = vmatpush2.bf16.msra.mxu0 0
    %223 = vmatprep.subr.bf16.mxu0 0
    %224 = vmatpush2.bf16.msra.mxu0 0
    %225 = vmatprep.subr.bf16.mxu0 0
    %226 = vmatpush2.bf16.msra.mxu0 0
    %227 = vmatprep.subr.bf16.mxu0 0
    %228 = vmatpush2.bf16.msra.mxu0 0
    %229 = vmatprep.subr.bf16.mxu0 0
    %230 = vmatpush2.bf16.msra.mxu0 0
    %231 = vmatprep.mubr.bf16.mxu0 0
    %232 = vmatmul.mubr.bf16.gmra.mxu0 %v146
    %v233 = vpop.f32.mrf.mxu0
    %v234 = vadd.f32 %v150, %v233
    %v235 = vpop.f32.mrf.mxu0
    %v236 = vpop.f32.mrf.mxu0
    %v237 = vpop.f32.mrf.mxu0
    %238 = vdwg.mxu0
    %v239 = vtanh.pop %v234
    %v240 = vpack.c.bf16 %v239, %v239
    %v241 = vlaneseq
    %v242 = vshrl.u32 %v241, 7
    %v243 = vsub.s32 0, %v242
    %v244 = vrot.slane %v81, %v243
    %v261 = vunpack.c.l.b16 %v64
    %v262 = vunpack.c.l.b16 %v65
    %v263 = vunpack.c.l.b16 %v66
    %v264 = vunpack.c.l.b16 %v67
    %v265 = vunpack.c.l.b16 %v68
    %v266 = vunpack.c.l.b16 %v69
    %v267 = vunpack.c.l.b16 %v70
    %v268 = vunpack.c.l.b16 %v71
    %v269 = vunpack.c.l.b16 %v72
    %v270 = vunpack.c.l.b16 %v73
    %v271 = vunpack.c.l.b16 %v74
    %v272 = vunpack.c.l.b16 %v75
    %v273 = vunpack.c.l.b16 %v76
    %v274 = vunpack.c.l.b16 %v77
    %v275 = vunpack.c.l.b16 %v78
    %v276 = vunpack.c.l.b16 %v79
    %v277 = vpack.c.b16 %v262, %v261
    %v278 = vpack.c.b16 %v264, %v263
    %v279 = vpack.c.b16 %v266, %v265
    %v280 = vpack.c.b16 %v268, %v267
    %v281 = vpack.c.b16 %v270, %v269
    %v282 = vpack.c.b16 %v272, %v271
    %v283 = vpack.c.b16 %v274, %v273
    %v284 = vpack.c.b16 %v276, %v275
    %293 = vmatprep.subr.bf16.mxu0 0
    %294 = vmatpush1.bf16.msra.mxu0 %v284
    %295 = vmatprep.subr.bf16.mxu0 0
    %296 = vmatpush1.bf16.msra.mxu0 %v283
    %297 = vmatprep.subr.bf16.mxu0 0
    %298 = vmatpush1.bf16.msra.mxu0 %v282
    %299 = vmatprep.subr.bf16.mxu0 0
    %300 = vmatpush1.bf16.msra.mxu0 %v281
    %301 = vmatprep.subr.bf16.mxu0 0
    %302 = vmatpush1.bf16.msra.mxu0 %v280
    %303 = vmatprep.subr.bf16.mxu0 0
    %304 = vmatpush1.bf16.msra.mxu0 %v279
    %305 = vmatprep.subr.bf16.mxu0 0
    %306 = vmatpush1.bf16.msra.mxu0 %v278
    %307 = vmatprep.subr.bf16.mxu0 0
    %308 = vmatpush1.bf16.msra.mxu0 %v277
    %309 = vmatprep.subr.bf16.mxu0 0
    %310 = vmatpush2.bf16.msra.mxu0 0
    %311 = vmatprep.subr.bf16.mxu0 0
    %312 = vmatpush2.bf16.msra.mxu0 0
    %313 = vmatprep.subr.bf16.mxu0 0
    %314 = vmatpush2.bf16.msra.mxu0 0
    %315 = vmatprep.subr.bf16.mxu0 0
    %316 = vmatpush2.bf16.msra.mxu0 0
    %317 = vmatprep.subr.bf16.mxu0 0
    %318 = vmatpush2.bf16.msra.mxu0 0
    %319 = vmatprep.subr.bf16.mxu0 0
    %320 = vmatpush2.bf16.msra.mxu0 0
    %321 = vmatprep.subr.bf16.mxu0 0
    %322 = vmatpush2.bf16.msra.mxu0 0
    %323 = vmatprep.subr.bf16.mxu0 0
    %324 = vmatpush2.bf16.msra.mxu0 0
    %325 = vmatprep.mubr.bf16.mxu0 0
    %326 = vmatmul.mubr.bf16.gmra.mxu0 %v240
    %v327 = vpop.f32.mrf.mxu0
    %v328 = vadd.f32 %v244, %v327
    %v329 = vpop.f32.mrf.mxu0
    %v330 = vpop.f32.mrf.mxu0
    %v331 = vpop.f32.mrf.mxu0
    %332 = vdwg.mxu0
    %vm333 = vcmask 130048
    %334 = vst.msk [vmem:[#allocation7] sm:$0xff] %vm333, %v328
    // Predicated region
    $region18: #{tpu_custom_call.1} parent=1 // pred_check
      _
    $region19: #{tpu_custom_call.1} parent=1 // pred_check_branch
      %336 = sbr.rel (0) target = $region21
    $region20: #{tpu_custom_call.1} parent=1 // pred_region
      %s338 = ssub.s32 128, 128
      %339 = vsyncadd [#allocation4], %s338
      %s341 = sshll.u32 [#allocation7], 4
      %s342 = int_to_ptr.vmem [resolvable:$true] %s341
      %344 = dma.vmem_to_hbm [thread:$0]  %s342, 128, %s2, [#allocation4]
    $region21: #{tpu_custom_call.1} parent=1 // pred_fallthru
      _
    // Predicated region
    $region22: #{tpu_custom_call.1} parent=1 // pred_check
      _
    $region23: #{tpu_custom_call.1} parent=1 // pred_check_branch
      %346 = sbr.rel (0) target = $region25
    $region24: #{tpu_custom_call.1} parent=1 // pred_region
      %347 = dma.done [#allocation4], 128
    $region25: #{tpu_custom_call.1} parent=1 // pred_fallthru
      _
    %348 = vsyncpa [#allocation3], 1
    %349 = vsyncpa [#allocation6], 1
    %350 = vsyncpa [#allocation4], 1

</llo_original>
